<compile_context>
chip_gen: v7x
topology: tpu7x:2x2x1
jax: 0.10.0
libtpu: 0.0.40
codegen_flags: <defaults>
</compile_context>

<pallas_src>
import functools

import jax
import jax.numpy as jnp
from jax import lax
from jax.experimental import pallas as pl
from jax.experimental.pallas import tpu as pltpu

_LANE = 128


def _head_kernel(x_ref, w1_ref, b1_ref, w2_ref, b2_ref, o_ref):
    """Fused dense -> tanh -> out_proj on a tile of CLS-token rows.

    x_ref : [TB, H]   CLS features (f32)
    w1_ref: [H, H]    dense weight, PyTorch [out, in] layout (bf16)
    b1_ref: [1, H]    dense bias (f32)
    w2_ref: [Lp, H]   out_proj weight, [out, in] layout, lane-padded (f32)
    b2_ref: [1, Lp]   out_proj bias, lane-padded (f32)
    o_ref : [TB, Lp]  logits (lane-padded)
    """
    # TODO(synk): dropout is identity here (inference semantics); training-mode
    # dropout would use pltpu.prng_seed / pltpu.prng_random_bits.

    # First matmul on the MXU in bf16 with f32 accumulation. Contract the last
    # axis of both operands (y[b, o] = sum_i x[b, i] * w1[o, i]) -- no
    # transpose materialized anywhere.
    x = x_ref[...].astype(w1_ref.dtype)
    h = lax.dot_general(
        x, w1_ref[...],
        dimension_numbers=(((1,), (1,)), ((), ())),
        preferred_element_type=jnp.float32,
    )
    h = jnp.tanh(h + b1_ref[...])          # bias + tanh in f32 (EUP slot)

    # Tiny out_proj in f32 (weight is [Lp, H], contract last axes again).
    y = lax.dot_general(
        h, w2_ref[...],
        dimension_numbers=(((1,), (1,)), ((), ())),
        preferred_element_type=jnp.float32,
    )
    o_ref[...] = (y + b2_ref[...]).astype(o_ref.dtype)


def roberta_classification_head(features, w_dense, b_dense, w_out, b_out,
                                *, block_b=128, dense_dtype=jnp.bfloat16):
    """features: [B, S, H]. Weights in PyTorch layout: w_dense [H, H],
    w_out [L, H]. Returns logits [B, L]."""
    B, S, H = features.shape
    L = w_out.shape[0]

    tb = min(block_b, B)
    if tb != B:
        # Keep sublane-aligned tiles whenever we actually tile the batch.
        tb = max(8, (tb // 8) * 8)

    # CLS extraction fused into the input DMA: view features as [B, S*H]
    # (free reshape for a contiguous row-major array) and let the BlockSpec
    # fetch only the first H lanes of each row, i.e. features[:, 0, :].
    if H % _LANE == 0:
        feat2d = features.reshape(B, S * H)
    else:
        # Fallback for lane-unaligned H: materialize the CLS slice so the
        # input block's lane extent equals the full array dim.
        feat2d = features[:, 0, :]

    # Weights stay in PyTorch [out, in] layout -- no transpose pass over HBM.
    # In production the bf16 cast of the dense weight happens once at load.
    w1 = w_dense.astype(dense_dtype)                  # [H, H]
    b1 = b_dense.reshape(1, H).astype(jnp.float32)    # [1, H]

    # Lane-pad the tiny out_proj so the kernel writes a lane-dense output slab
    # (unmasked vst) and the second matmul yields a full-lane MXU result.
    Lp = _LANE * pl.cdiv(L, _LANE)
    w2 = w_out.astype(jnp.float32)
    b2 = b_out.reshape(1, L).astype(jnp.float32)
    if Lp != L:
        w2 = jnp.pad(w2, ((0, Lp - L), (0, 0)))       # [Lp, H]
        b2 = jnp.pad(b2, ((0, 0), (0, Lp - L)))       # [1, Lp]

    # Advisory cost hint for XLA's scheduler around the custom call.
    w1_bytes = jnp.dtype(dense_dtype).itemsize
    cost = pl.CostEstimate(
        flops=2 * B * H * H + 2 * B * H * Lp,
        transcendentals=B * H,
        bytes_accessed=(B * H * 4 + H * H * w1_bytes + Lp * H * 4
                        + H * 4 + Lp * 4 + B * Lp * 4),
    )

    grid = (pl.cdiv(B, tb),)
    out_padded = pl.pallas_call(
        _head_kernel,
        out_shape=jax.ShapeDtypeStruct((B, Lp), features.dtype),
        grid=grid,
        in_specs=[
            pl.BlockSpec((tb, H), lambda i: (i, 0)),   # CLS rows only
            pl.BlockSpec((H, H), lambda i: (0, 0)),    # dense W: VMEM-resident
            pl.BlockSpec((1, H), lambda i: (0, 0)),    # dense b
            pl.BlockSpec((Lp, H), lambda i: (0, 0)),   # out_proj W (padded)
            pl.BlockSpec((1, Lp), lambda i: (0, 0)),   # out_proj b (padded)
        ],
        out_specs=pl.BlockSpec((tb, Lp), lambda i: (i, 0)),
        compiler_params=pltpu.CompilerParams(
            dimension_semantics=("parallel",)),
        cost_estimate=cost,
    )(feat2d, w1, b1, w2, b2)

    return out_padded if Lp == L else out_padded[:, :L]


def _reference(features, w_dense, b_dense, w_out, b_out):
    x = features[:, 0, :]
    x = jnp.tanh(x @ w_dense.T + b_dense)
    return x @ w_out.T + b_out


if __name__ == "__main__":
    # Small, module-consistent shapes: batch=16, seq=8, hidden=128, labels=4.
    # H=128 keeps the lane dim aligned (like RoBERTa's 768/1024 in prod);
    # block_b=8 gives a 2-step batch grid to exercise the tiled path.
    B, S, H, L = 16, 8, 128, 4

    key = jax.random.PRNGKey(0)
    k_feat, k_w1, k_b1, k_w2, k_b2 = jax.random.split(key, 5)

    features = jax.random.normal(k_feat, (B, S, H), dtype=jnp.float32)

    # Deterministic nn.Linear-style init: uniform(-1/sqrt(fan_in), 1/sqrt(fan_in)).
    lim = 1.0 / jnp.sqrt(H)
    w_dense = jax.random.uniform(k_w1, (H, H), jnp.float32, -lim, lim)
    b_dense = jax.random.uniform(k_b1, (H,), jnp.float32, -lim, lim)
    w_out = jax.random.uniform(k_w2, (L, H), jnp.float32, -lim, lim)
    b_out = jax.random.uniform(k_b2, (L,), jnp.float32, -lim, lim)

    head_fn = jax.jit(functools.partial(roberta_classification_head, block_b=8))
    logits = head_fn(features, w_dense, b_dense, w_out, b_out)
    logits = jax.block_until_ready(logits)

    ref = _reference(features, w_dense, b_dense, w_out, b_out)
    assert logits.shape == (B, L), logits.shape
    # bf16 H x H matmul with f32 accumulation: loosened tolerance vs f32 ref.
    assert jnp.allclose(logits, ref, atol=5e-2, rtol=5e-2), (
        "mismatch vs reference: max abs err = "
        f"{float(jnp.max(jnp.abs(logits - ref)))}")

    print("KERNEL_OK")
</pallas_src>

<mosaic_0001>
module attributes {stable_mosaic.version = 11 : i64} {
  func.func @_head_kernel(%arg0: i32, %arg1: memref<8x128xf32, #tpu.memory_space<vmem>>, %arg2: memref<128x128xbf16, #tpu.memory_space<vmem>>, %arg3: memref<1x128xf32, #tpu.memory_space<vmem>>, %arg4: memref<128x128xf32, #tpu.memory_space<vmem>>, %arg5: memref<1x128xf32, #tpu.memory_space<vmem>>, %arg6: memref<8x128xf32, #tpu.memory_space<vmem>>) attributes {dimension_semantics = [#tpu.dimension_semantics<parallel>], iteration_bounds = array<i64: 2>, scalar_prefetch = 0 : i64, scratch_operands = 0 : i64, tpu.core_type = #tpu.core_type<tc>, window_params = [{transform_indices = @transform_0, window_bounds = array<i64: 8, 128>}, {pipeline_mode = #tpu.pipeline_mode<synchronous>, transform_indices = @transform_1, window_bounds = array<i64: 128, 128>}, {pipeline_mode = #tpu.pipeline_mode<synchronous>, transform_indices = @transform_2, window_bounds = array<i64: 1, 128>}, {pipeline_mode = #tpu.pipeline_mode<synchronous>, transform_indices = @transform_3, window_bounds = array<i64: 128, 128>}, {pipeline_mode = #tpu.pipeline_mode<synchronous>, transform_indices = @transform_4, window_bounds = array<i64: 1, 128>}, {transform_indices = @transform_5, window_bounds = array<i64: 8, 128>}]} {
    %c0 = arith.constant 0 : index
    %c0_0 = arith.constant 0 : index
    %0 = vector.load %arg1[%c0, %c0_0] : memref<8x128xf32, #tpu.memory_space<vmem>>, vector<8x128xf32>
    %1 = arith.truncf %0 : vector<8x128xf32> to vector<8x128xbf16>
    %c0_1 = arith.constant 0 : index
    %c0_2 = arith.constant 0 : index
    %2 = vector.load %arg2[%c0_1, %c0_2] : memref<128x128xbf16, #tpu.memory_space<vmem>>, vector<128x128xbf16>
    %cst = arith.constant dense<0.000000e+00> : vector<8x128xf32>
    %3 = tpu.matmul %1, %2, %cst {dimension_numbers = #tpu.dot_dimension_numbers<[1], [1], [0], [0], [0, 0, 1, 0], [], []>} : vector<8x128xbf16>, vector<128x128xbf16>, vector<8x128xf32> -> vector<8x128xf32>
    %c0_3 = arith.constant 0 : index
    %c0_4 = arith.constant 0 : index
    %4 = vector.load %arg3[%c0_3, %c0_4] : memref<1x128xf32, #tpu.memory_space<vmem>>, vector<1x128xf32>
    %5 = vector.broadcast %4 : vector<1x128xf32> to vector<8x128xf32>
    %6 = arith.addf %3, %5 : vector<8x128xf32>
    %7 = math.tanh %6 : vector<8x128xf32>
    %c0_5 = arith.constant 0 : index
    %c0_6 = arith.constant 0 : index
    %8 = vector.load %arg4[%c0_5, %c0_6] : memref<128x128xf32, #tpu.memory_space<vmem>>, vector<128x128xf32>
    %cst_7 = arith.constant dense<0.000000e+00> : vector<8x128xf32>
    %9 = tpu.matmul %7, %8, %cst_7 {dimension_numbers = #tpu.dot_dimension_numbers<[1], [1], [0], [0], [0, 0, 1, 0], [], []>} : vector<8x128xf32>, vector<128x128xf32>, vector<8x128xf32> -> vector<8x128xf32>
    %c0_8 = arith.constant 0 : index
    %c0_9 = arith.constant 0 : index
    %10 = vector.load %arg5[%c0_8, %c0_9] : memref<1x128xf32, #tpu.memory_space<vmem>>, vector<1x128xf32>
    %11 = vector.broadcast %10 : vector<1x128xf32> to vector<8x128xf32>
    %12 = arith.addf %9, %11 : vector<8x128xf32>
    %c0_10 = arith.constant 0 : index
    %c0_11 = arith.constant 0 : index
    %13 = vector.load %arg6[%c0_10, %c0_11] : memref<8x128xf32, #tpu.memory_space<vmem>>, vector<8x128xf32>
    tpu.vector_store %arg6[%c0_10, %c0_11], %12 {strides = array<i32>} : memref<8x128xf32, #tpu.memory_space<vmem>>, vector<8x128xf32>,
    return
  }
  func.func @transform_0(%arg0: i32) -> (i32, i32) {
    %c0_i32 = arith.constant 0 : i32
    %c0_i32_0 = arith.constant 0 : i32
    return %arg0, %c0_i32 : i32, i32
  }
  func.func @transform_1(%arg0: i32) -> (i32, i32) {
    %c0_i32 = arith.constant 0 : i32
    %c0_i32_0 = arith.constant 0 : i32
    %c0_i32_1 = arith.constant 0 : i32
    return %c0_i32, %c0_i32_0 : i32, i32
  }
  func.func @transform_2(%arg0: i32) -> (i32, i32) {
    %c0_i32 = arith.constant 0 : i32
    %c0_i32_0 = arith.constant 0 : i32
    %c0_i32_1 = arith.constant 0 : i32
    return %c0_i32, %c0_i32_0 : i32, i32
  }
  func.func @transform_3(%arg0: i32) -> (i32, i32) {
    %c0_i32 = arith.constant 0 : i32
    %c0_i32_0 = arith.constant 0 : i32
    %c0_i32_1 = arith.constant 0 : i32
    return %c0_i32, %c0_i32_0 : i32, i32
  }
  func.func @transform_4(%arg0: i32) -> (i32, i32) {
    %c0_i32 = arith.constant 0 : i32
    %c0_i32_0 = arith.constant 0 : i32
    %c0_i32_1 = arith.constant 0 : i32
    return %c0_i32, %c0_i32_0 : i32, i32
  }
  func.func @transform_5(%arg0: i32) -> (i32, i32) {
    %c0_i32 = arith.constant 0 : i32
    %c0_i32_0 = arith.constant 0 : i32
    return %arg0, %c0_i32 : i32, i32
  }
}

</mosaic_0001>

<llo_original>
// kernel: roberta_classification_head.1
$region0: #{roberta_classification_head.1}
  #allocation0 [shape = 'u32[]', space=smem, size = 0x4, offset = 0x4, fixed_abs, tag = 'smem constant byte address 0x4 - core index']
  #allocation1 [shape = 'u32[144,128]{1,0:T(1,128)}', space=vmem, size = 0x12000, scoped, tag = 'internal scratch']
  %s0 = inlined_call_operand.vmem [shape: f32[16,1024], index: 0, kind: input, shape index: {}]
  %s1 = inlined_call_operand.vmem [shape: bf16[128,128], index: 1, kind: input, shape index: {}]
  %s2 = inlined_call_operand.vmem [shape: f32[1,128], index: 2, kind: input, shape index: {}]
  %s3 = inlined_call_operand.vmem [shape: f32[128,128], index: 3, kind: input, shape index: {}]
  %s4 = inlined_call_operand.vmem [shape: f32[1,128], index: 4, kind: input, shape index: {}]
  %s5 = inlined_call_operand.vmem [shape: f32[16,128], index: 5, kind: output, shape index: {}]
  %s6 = sld [smem:[#allocation0]]
  $region53: #{roberta_classification_head.1} parent=0
    _
  %s8 = ssub.s32 1, %s6
  %s9 = scalar_select 0, %s8, %s6
  loop: start=0, step=1, limit=4
  $region2: #{roberta_classification_head.1} parent=0 // loop_pre_header
    _
  $region3: #{roberta_classification_head.1} parent=0 // loop_header
    %s11 = sphi 0, %s15
    %p12 = scmp.ge.s32.totalorder %s11, 4
    %s21 = sphi 0, %s23
    %s24 = sphi 0, %s21
    %s25 = sphi 0, %s24
    %s41 = sphi 0, %s25
    %s45 = sphi 0, %s45
    %s47 = sphi 0, %s45
    %s48 = sphi 0, %s47
    %s62 = sphi 0, %s48
    %s66 = sphi 0, %s66
    %s68 = sphi 0, %s66
    %s69 = sphi 0, %s68
    %s83 = sphi 0, %s69
    %s87 = sphi 0, %s87
    %s89 = sphi 0, %s87
    %s90 = sphi 0, %s89
    %s104 = sphi 0, %s90
    %s108 = sphi 0, %s108
    %s110 = sphi 0, %s108
    %s111 = sphi 0, %s110
    %s125 = sphi 0, %s111
    %s131 = sphi 0, %s133
    %s134 = sphi 0, %s131
    %s135 = sphi 0, %s134
    %s151 = sphi 0, %s135
  $region4: #{roberta_classification_head.1} parent=0 // loop_header_branch
    %14 = sbr.rel (%p12) target = $region8
  $region5: #{roberta_classification_head.1} parent=0 // loop_body
    %s16 = ssub.s32 %s11, 1
    %s17 = ssub.s32 %s11, 2
    %s18 = sadd.s32 %s11, 1
    %s19 = ssub.s32 %s11, %s18
    %p20 = scmp.eq.s32.totalorder %s19, 0
    %s22 = sadd.s32 %s21, 1
    %s23 = scalar_select %p20, %s21, %s22
    %p26 = pneg %p20
    %p27 = scmp.eq.s32.totalorder %s11, 1
    %p28 = por %p26, %p27
    %p29 = scmp.ne.s32.totalorder %s21, %s24
    %p30 = scmp.eq.s32.totalorder %s11, 0
    %p31 = por %p29, %p30
    %p32 = scmp.ne.s32.totalorder %s21, %s24
    %p33 = scmp.eq.s32.totalorder %s16, 1
    %p34 = por %p32, %p33
    %p35 = scmp.ne.s32.totalorder %s24, %s25
    %p36 = scmp.eq.s32.totalorder %s16, 0
    %p37 = por %p35, %p36
    %p38 = scmp.ne.s32.totalorder %s24, %s25
    %p39 = scmp.eq.s32.totalorder %s17, 1
    %p40 = por %p38, %p39
    %p42 = scmp.ne.s32.totalorder %s25, %s41
    %p43 = scmp.eq.s32.totalorder %s17, 0
    %p44 = por %p42, %p43
    %s46 = sadd.s32 %s45, 1
    %p49 = scmp.eq.s32.totalorder %s11, 1
    %p50 = scmp.ne.s32.totalorder %s45, %s47
    %p51 = scmp.eq.s32.totalorder %s11, 0
    %p52 = por %p50, %p51
    %p53 = scmp.ne.s32.totalorder %s45, %s47
    %p54 = scmp.eq.s32.totalorder %s16, 1
    %p55 = por %p53, %p54
    %p56 = scmp.ne.s32.totalorder %s47, %s48
    %p57 = scmp.eq.s32.totalorder %s16, 0
    %p58 = por %p56, %p57
    %p59 = scmp.ne.s32.totalorder %s47, %s48
    %p60 = scmp.eq.s32.totalorder %s17, 1
    %p61 = por %p59, %p60
    %p63 = scmp.ne.s32.totalorder %s48, %s62
    %p64 = scmp.eq.s32.totalorder %s17, 0
    %p65 = por %p63, %p64
    %s67 = sadd.s32 %s66, 1
    %p70 = scmp.eq.s32.totalorder %s11, 1
    %p71 = scmp.ne.s32.totalorder %s66, %s68
    %p72 = scmp.eq.s32.totalorder %s11, 0
    %p73 = por %p71, %p72
    %p74 = scmp.ne.s32.totalorder %s66, %s68
    %p75 = scmp.eq.s32.totalorder %s16, 1
    %p76 = por %p74, %p75
    %p77 = scmp.ne.s32.totalorder %s68, %s69
    %p78 = scmp.eq.s32.totalorder %s16, 0
    %p79 = por %p77, %p78
    %p80 = scmp.ne.s32.totalorder %s68, %s69
    %p81 = scmp.eq.s32.totalorder %s17, 1
    %p82 = por %p80, %p81
    %p84 = scmp.ne.s32.totalorder %s69, %s83
    %p85 = scmp.eq.s32.totalorder %s17, 0
    %p86 = por %p84, %p85
    %s88 = sadd.s32 %s87, 1
    %p91 = scmp.eq.s32.totalorder %s11, 1
    %p92 = scmp.ne.s32.totalorder %s87, %s89
    %p93 = scmp.eq.s32.totalorder %s11, 0
    %p94 = por %p92, %p93
    %p95 = scmp.ne.s32.totalorder %s87, %s89
    %p96 = scmp.eq.s32.totalorder %s16, 1
    %p97 = por %p95, %p96
    %p98 = scmp.ne.s32.totalorder %s89, %s90
    %p99 = scmp.eq.s32.totalorder %s16, 0
    %p100 = por %p98, %p99
    %p101 = scmp.ne.s32.totalorder %s89, %s90
    %p102 = scmp.eq.s32.totalorder %s17, 1
    %p103 = por %p101, %p102
    %p105 = scmp.ne.s32.totalorder %s90, %s104
    %p106 = scmp.eq.s32.totalorder %s17, 0
    %p107 = por %p105, %p106
    %s109 = sadd.s32 %s108, 1
    %p112 = scmp.eq.s32.totalorder %s11, 1
    %p113 = scmp.ne.s32.totalorder %s108, %s110
    %p114 = scmp.eq.s32.totalorder %s11, 0
    %p115 = por %p113, %p114
    %p116 = scmp.ne.s32.totalorder %s108, %s110
    %p117 = scmp.eq.s32.totalorder %s16, 1
    %p118 = por %p116, %p117
    %p119 = scmp.ne.s32.totalorder %s110, %s111
    %p120 = scmp.eq.s32.totalorder %s16, 0
    %p121 = por %p119, %p120
    %p122 = scmp.ne.s32.totalorder %s110, %s111
    %p123 = scmp.eq.s32.totalorder %s17, 1
    %p124 = por %p122, %p123
    %p126 = scmp.ne.s32.totalorder %s111, %s125
    %p127 = scmp.eq.s32.totalorder %s17, 0
    %p128 = por %p126, %p127
    %s129 = ssub.s32 %s11, %s18
    %p130 = scmp.eq.s32.totalorder %s129, 0
    %s132 = sadd.s32 %s131, 1
    %s133 = scalar_select %p130, %s131, %s132
    %p136 = pneg %p130
    %p137 = scmp.eq.s32.totalorder %s11, 1
    %p138 = por %p136, %p137
    %p139 = scmp.ne.s32.totalorder %s131, %s134
    %p140 = scmp.eq.s32.totalorder %s11, 0
    %p141 = por %p139, %p140
    %p142 = scmp.ne.s32.totalorder %s131, %s134
    %p143 = scmp.eq.s32.totalorder %s16, 1
    %p144 = por %p142, %p143
    %p145 = scmp.ne.s32.totalorder %s134, %s135
    %p146 = scmp.eq.s32.totalorder %s16, 0
    %p147 = por %p145, %p146
    %p148 = scmp.ne.s32.totalorder %s134, %s135
    %p149 = scmp.eq.s32.totalorder %s17, 1
    %p150 = por %p148, %p149
    %p152 = scmp.ne.s32.totalorder %s135, %s151
    %p153 = scmp.eq.s32.totalorder %s17, 0
    %p154 = por %p152, %p153
    %p155 = scmp.le.s32.totalorder 1, %s11
    %p156 = scmp.lt.s32.totalorder %s11, 3
    %p157 = pnand %p155, %p156
    %p158 = pneg %p157
    // Predicated region
    $region9: #{roberta_classification_head.1} parent=5 // pred_check
      _
    $region10: #{roberta_classification_head.1} parent=5 // pred_check_branch
      %160 = sbr.rel (%p157) target = $region12
    $region11: #{roberta_classification_head.1} parent=5 // pred_region
      %s161 = ssub.s32 %s11, 1
      // Predicated region
      $region13: #{roberta_classification_head.1} parent=11 // pred_check
        %p162 = pneg %p58
      $region14: #{roberta_classification_head.1} parent=11 // pred_check_branch
        %164 = sbr.rel (%p162) target = $region16
      $region15: #{roberta_classification_head.1} parent=11 // pred_region
        _
      $region16: #{roberta_classification_head.1} parent=11 // pred_fallthru
        _
      // Predicated region
      $region17: #{roberta_classification_head.1} parent=11 // pred_check
        %p165 = pneg %p79
      $region18: #{roberta_classification_head.1} parent=11 // pred_check_branch
        %167 = sbr.rel (%p165) target = $region20
      $region19: #{roberta_classification_head.1} parent=11 // pred_region
        _
      $region20: #{roberta_classification_head.1} parent=11 // pred_fallthru
        _
      // Predicated region
      $region21: #{roberta_classification_head.1} parent=11 // pred_check
        %p168 = pneg %p100
      $region22: #{roberta_classification_head.1} parent=11 // pred_check_branch
        %170 = sbr.rel (%p168) target = $region24
      $region23: #{roberta_classification_head.1} parent=11 // pred_region
        _
      $region24: #{roberta_classification_head.1} parent=11 // pred_fallthru
        _
      // Predicated region
      $region25: #{roberta_classification_head.1} parent=11 // pred_check
        %p171 = pneg %p121
      $region26: #{roberta_classification_head.1} parent=11 // pred_check_branch
        %173 = sbr.rel (%p171) target = $region28
      $region27: #{roberta_classification_head.1} parent=11 // pred_region
        _
      $region28: #{roberta_classification_head.1} parent=11 // pred_fallthru
        _
    $region12: #{roberta_classification_head.1} parent=5 // pred_fallthru
      _
    %p174 = scmp.lt.s32.totalorder %s11, 2
    // Predicated region
    $region29: #{roberta_classification_head.1} parent=5 // pred_check
      %p175 = pneg %p174
    $region30: #{roberta_classification_head.1} parent=5 // pred_check_branch
      %177 = sbr.rel (%p175) target = $region32
    $region31: #{roberta_classification_head.1} parent=5 // pred_region
      // Predicated region
      $region33: #{roberta_classification_head.1} parent=31 // pred_check
        %p178 = pneg %p31
      $region34: #{roberta_classification_head.1} parent=31 // pred_check_branch
        %180 = sbr.rel (%p178) target = $region36
      $region35: #{roberta_classification_head.1} parent=31 // pred_region
        %p181 = scmp.lt.s32.totalorder %s11, 1
        %s182 = scalar_select %p181, %s11, 1
        %s183 = smul.addr %s182, 8
        %s184 = smul.addr %s183, 8
        %s185 = scalar_lea.vmem %s0, %s184
      $region36: #{roberta_classification_head.1} parent=31 // pred_fallthru
        _
    $region32: #{roberta_classification_head.1} parent=5 // pred_fallthru
      _
    %p186 = scmp.le.s32.totalorder 1, %s11
    %p187 = scmp.lt.s32.totalorder %s11, 3
    %p188 = pnand %p186, %p187
    %p189 = pneg %p188
    // Predicated region
    $region37: #{roberta_classification_head.1} parent=5 // pred_check
      _
    $region38: #{roberta_classification_head.1} parent=5 // pred_check_branch
      %191 = sbr.rel (%p188) target = $region40
    $region39: #{roberta_classification_head.1} parent=5 // pred_region
      %s192 = ssub.s32 %s11, 1
      %p193 = scmp.lt.s32.totalorder %s16, 1
      %s194 = scalar_select %p193, %s16, 1
      %s195 = smul.addr %s194, 8
      %s196 = smul.addr %s195, 8
      %s197 = scalar_lea.vmem %s0, %s196
      %p198 = pneg %p37
      %p199 = pneg %p34
      %p200 = pneg %p58
      %p201 = pneg %p55
      %p202 = pneg %p79
      %p203 = pneg %p76
      %p204 = pneg %p100
      %p205 = pneg %p97
      %p206 = pneg %p121
      %p207 = pneg %p118
      %p208 = pneg %p147
      %p209 = pneg %p144
      %p210 = scmp.lt.s32.totalorder %s16, 1
      %s211 = scalar_select %p210, %s16, 1
      %s212 = smul.addr %s211, 8
      %s213 = scalar_lea.vmem %s5, %s212
      %p214 = scmp.lt.s32.totalorder %s16, 1
      %s215 = scalar_select %p214, %s16, 1
      %s216 = smul.addr %s215, 8
      %s217 = smul.addr %s216, 8
      %s218 = scalar_lea.vmem %s0, %s217
      %p219 = scmp.lt.s32.totalorder %s16, 1
      %s220 = scalar_select %p219, %s16, 1
      %s221 = smul.addr %s220, 8
      %s222 = scalar_lea.vmem %s5, %s221
      %v224 = vld [vmem:[%s218] sm:$0xff]
      %v225 = vpack.c.bf16 %v224, %v224
      %v226 = vld [vmem:[%s1] sm:$0xf]
      %v227 = vld [vmem:[%s1 + $0x4] sm:$0xf]
      %v228 = vld [vmem:[%s1 + $0x8] sm:$0xf]
      %v229 = vld [vmem:[%s1 + $0xc] sm:$0xf]
      %v230 = vld [vmem:[%s1 + $0x10] sm:$0xf]
      %v231 = vld [vmem:[%s1 + $0x14] sm:$0xf]
      %v232 = vld [vmem:[%s1 + $0x18] sm:$0xf]
      %v233 = vld [vmem:[%s1 + $0x1c] sm:$0xf]
      %v234 = vld [vmem:[%s1 + $0x20] sm:$0xf]
      %v235 = vld [vmem:[%s1 + $0x24] sm:$0xf]
      %v236 = vld [vmem:[%s1 + $0x28] sm:$0xf]
      %v237 = vld [vmem:[%s1 + $0x2c] sm:$0xf]
      %v238 = vld [vmem:[%s1 + $0x30] sm:$0xf]
      %v239 = vld [vmem:[%s1 + $0x34] sm:$0xf]
      %v240 = vld [vmem:[%s1 + $0x38] sm:$0xf]
      %v241 = vld [vmem:[%s1 + $0x3c] sm:$0xf]
      %v242 = vld [vmem:[%s2] sm:$0x1]
      %v244 = vlaneseq
      %v245 = vshrl.u32 %v244, 7
      %v246 = vsub.s32 0, %v245
      %v247 = vrot.slane %v242, %v246
      %v265 = vunpack.c.l.b16 %v226
      %v266 = vunpack.c.l.b16 %v227
      %v267 = vunpack.c.l.b16 %v228
      %v268 = vunpack.c.l.b16 %v229
      %v269 = vunpack.c.l.b16 %v230
      %v270 = vunpack.c.l.b16 %v231
      %v271 = vunpack.c.l.b16 %v232
      %v272 = vunpack.c.l.b16 %v233
      %v273 = vunpack.c.l.b16 %v234
      %v274 = vunpack.c.l.b16 %v235
      %v275 = vunpack.c.l.b16 %v236
      %v276 = vunpack.c.l.b16 %v237
      %v277 = vunpack.c.l.b16 %v238
      %v278 = vunpack.c.l.b16 %v239
      %v279 = vunpack.c.l.b16 %v240
      %v280 = vunpack.c.l.b16 %v241
      %v281 = vpack.c.b16 %v266, %v265
      %v282 = vpack.c.b16 %v268, %v267
      %v283 = vpack.c.b16 %v270, %v269
      %v284 = vpack.c.b16 %v272, %v271
      %v285 = vpack.c.b16 %v274, %v273
      %v286 = vpack.c.b16 %v276, %v275
      %v287 = vpack.c.b16 %v278, %v277
      %v288 = vpack.c.b16 %v280, %v279
      %297 = vmatprep.subr.bf16.mxu0 0
      %298 = vmatpush1.bf16.xpose.msra.mxu0 %v281
      %299 = vmatprep.subr.bf16.mxu0 0
      %300 = vmatpush1.bf16.xpose.msra.mxu0 %v282
      %301 = vmatprep.subr.bf16.mxu0 0
      %302 = vmatpush1.bf16.xpose.msra.mxu0 %v283
      %303 = vmatprep.subr.bf16.mxu0 0
      %304 = vmatpush1.bf16.xpose.msra.mxu0 %v284
      %305 = vmatprep.subr.bf16.mxu0 0
      %306 = vmatpush1.bf16.xpose.msra.mxu0 %v285
      %307 = vmatprep.subr.bf16.mxu0 0
      %308 = vmatpush1.bf16.xpose.msra.mxu0 %v286
      %309 = vmatprep.subr.bf16.mxu0 0
      %310 = vmatpush1.bf16.xpose.msra.mxu0 %v287
      %311 = vmatprep.subr.bf16.mxu0 0
      %312 = vmatpush1.bf16.xpose.msra.mxu0 %v288
      %313 = vmatprep.subr.bf16.mxu0 0
      %314 = vmatpush1.bf16.xpose.msra.mxu0 0
      %315 = vmatprep.subr.bf16.mxu0 0
      %316 = vmatpush1.bf16.xpose.msra.mxu0 0
      %317 = vmatprep.subr.bf16.mxu0 0
      %318 = vmatpush1.bf16.xpose.msra.mxu0 0
      %319 = vmatprep.subr.bf16.mxu0 0
      %320 = vmatpush1.bf16.xpose.msra.mxu0 0
      %321 = vmatprep.subr.bf16.mxu0 0
      %322 = vmatpush1.bf16.xpose.msra.mxu0 0
      %323 = vmatprep.subr.bf16.mxu0 0
      %324 = vmatpush1.bf16.xpose.msra.mxu0 0
      %325 = vmatprep.subr.bf16.mxu0 0
      %326 = vmatpush1.bf16.xpose.msra.mxu0 0
      %327 = vmatprep.subr.bf16.mxu0 0
      %328 = vmatpush1.bf16.xpose.msra.mxu0 0
      %329 = vmatprep.mubr.bf16.mxu0 0
      %330 = vmatmul.mubr.bf16.gmra.mrb[0].mxu0 %v225
      %v331 = vpop.f32.mrb[0].mxu0
      %v332 = vadd.f32 %v247, %v331
      %v333 = vpop.f32.mrb[0].mxu0
      %v334 = vpop.f32.mrb[0].mxu0
      %v335 = vpop.f32.mrb[0].mxu0
      %336 = vdwg.mxu0
      %v337 = vtanh.pop %v332
      %v338 = vld [vmem:[%s3] sm:$0xff]
      %v339 = vld [vmem:[%s3 + $0x8] sm:$0xff]
      %v340 = vld [vmem:[%s3 + $0x10] sm:$0xff]
      %v341 = vld [vmem:[%s3 + $0x18] sm:$0xff]
      %v342 = vld [vmem:[%s3 + $0x20] sm:$0xff]
      %v343 = vld [vmem:[%s3 + $0x28] sm:$0xff]
      %v344 = vld [vmem:[%s3 + $0x30] sm:$0xff]
      %v345 = vld [vmem:[%s3 + $0x38] sm:$0xff]
      %v346 = vld [vmem:[%s3 + $0x40] sm:$0xff]
      %v347 = vld [vmem:[%s3 + $0x48] sm:$0xff]
      %v348 = vld [vmem:[%s3 + $0x50] sm:$0xff]
      %v349 = vld [vmem:[%s3 + $0x58] sm:$0xff]
      %v350 = vld [vmem:[%s3 + $0x60] sm:$0xff]
      %v351 = vld [vmem:[%s3 + $0x68] sm:$0xff]
      %v352 = vld [vmem:[%s3 + $0x70] sm:$0xff]
      %v353 = vld [vmem:[%s3 + $0x78] sm:$0xff]
      %v354 = vld [vmem:[%s4] sm:$0x1]
      %v356 = vlaneseq
      %v357 = vshrl.u32 %v356, 7
      %v358 = vsub.s32 0, %v357
      %v359 = vrot.slane %v354, %v358
      %361 = vmatprep.subr.mxu0 0.0
      %362 = vmatpush1.xpose.msra.mxu0 %v338
      %363 = vmatprep.subr.mxu0 0.0
      %364 = vmatpush1.xpose.msra.mxu0 %v339
      %365 = vmatprep.subr.mxu0 0.0
      %366 = vmatpush1.xpose.msra.mxu0 %v340
      %367 = vmatprep.subr.mxu0 0.0
      %368 = vmatpush1.xpose.msra.mxu0 %v341
      %369 = vmatprep.subr.mxu0 0.0
      %370 = vmatpush1.xpose.msra.mxu0 %v342
      %371 = vmatprep.subr.mxu0 0.0
      %372 = vmatpush1.xpose.msra.mxu0 %v343
      %373 = vmatprep.subr.mxu0 0.0
      %374 = vmatpush1.xpose.msra.mxu0 %v344
      %375 = vmatprep.subr.mxu0 0.0
      %376 = vmatpush1.xpose.msra.mxu0 %v345
      %377 = vmatprep.subr.mxu0 0.0
      %378 = vmatpush1.xpose.msra.mxu0 %v346
      %379 = vmatprep.subr.mxu0 0.0
      %380 = vmatpush1.xpose.msra.mxu0 %v347
      %381 = vmatprep.subr.mxu0 0.0
      %382 = vmatpush1.xpose.msra.mxu0 %v348
      %383 = vmatprep.subr.mxu0 0.0
      %384 = vmatpush1.xpose.msra.mxu0 %v349
      %385 = vmatprep.subr.mxu0 0.0
      %386 = vmatpush1.xpose.msra.mxu0 %v350
      %387 = vmatprep.subr.mxu0 0.0
      %388 = vmatpush1.xpose.msra.mxu0 %v351
      %389 = vmatprep.subr.mxu0 0.0
      %390 = vmatpush1.xpose.msra.mxu0 %v352
      %391 = vmatprep.subr.mxu0 0.0
      %392 = vmatpush1.xpose.msra.mxu0 %v353
      %393 = vmatprep.subr.mxu0 0.0
      %394 = vmatpush1.xpose.msra.mxu0 0.0
      %395 = vmatprep.subr.mxu0 0.0
      %396 = vmatpush1.xpose.msra.mxu0 0.0
      %397 = vmatprep.subr.mxu0 0.0
      %398 = vmatpush1.xpose.msra.mxu0 0.0
      %399 = vmatprep.subr.mxu0 0.0
      %400 = vmatpush1.xpose.msra.mxu0 0.0
      %401 = vmatprep.subr.mxu0 0.0
      %402 = vmatpush1.xpose.msra.mxu0 0.0
      %403 = vmatprep.subr.mxu0 0.0
      %404 = vmatpush1.xpose.msra.mxu0 0.0
      %405 = vmatprep.subr.mxu0 0.0
      %406 = vmatpush1.xpose.msra.mxu0 0.0
      %407 = vmatprep.subr.mxu0 0.0
      %408 = vmatpush1.xpose.msra.mxu0 0.0
      %409 = vmatprep.subr.mxu0 0.0
      %410 = vmatpush1.xpose.msra.mxu0 0.0
      %411 = vmatprep.subr.mxu0 0.0
      %412 = vmatpush1.xpose.msra.mxu0 0.0
      %413 = vmatprep.subr.mxu0 0.0
      %414 = vmatpush1.xpose.msra.mxu0 0.0
      %415 = vmatprep.subr.mxu0 0.0
      %416 = vmatpush1.xpose.msra.mxu0 0.0
      %417 = vmatprep.subr.mxu0 0.0
      %418 = vmatpush1.xpose.msra.mxu0 0.0
      %419 = vmatprep.subr.mxu0 0.0
      %420 = vmatpush1.xpose.msra.mxu0 0.0
      %421 = vmatprep.subr.mxu0 0.0
      %422 = vmatpush1.xpose.msra.mxu0 0.0
      %423 = vmatprep.subr.mxu0 0.0
      %424 = vmatpush1.xpose.msra.mxu0 0.0
      %425 = vmatprep.mubr.f32.mxu0 0.0
      %426 = vmatmul.mubr.f32.gmra.mrb[0].mxu0 %v337
      %v427 = vpop.f32.mrb[0].mxu0
      %v428 = vadd.f32 %v359, %v427
      %v429 = vpop.f32.mrb[0].mxu0
      %430 = vdwg.mxu0
      %431 = vst [vmem:[%s222] sm:$0xff] %v428
      %p432 = scmp.lt.s32.totalorder %s16, 1
      %s433 = scalar_select %p432, %s16, 1
      %s434 = smul.addr %s433, 8
      %s435 = scalar_lea.vmem %s5, %s434
      // Predicated region
      $region41: #{roberta_classification_head.1} parent=39 // pred_check
        %p436 = pneg %p144
      $region42: #{roberta_classification_head.1} parent=39 // pred_check_branch
        %438 = sbr.rel (%p436) target = $region44
      $region43: #{roberta_classification_head.1} parent=39 // pred_region
        _
      $region44: #{roberta_classification_head.1} parent=39 // pred_fallthru
        _
    $region40: #{roberta_classification_head.1} parent=5 // pred_fallthru
      _
    %p439 = scmp.le.s32.totalorder 2, %s11
    // Predicated region
    $region45: #{roberta_classification_head.1} parent=5 // pred_check
      %p440 = pneg %p439
    $region46: #{roberta_classification_head.1} parent=5 // pred_check_branch
      %442 = sbr.rel (%p440) target = $region48
    $region47: #{roberta_classification_head.1} parent=5 // pred_region
      %s443 = ssub.s32 %s11, 2
      // Predicated region
      $region49: #{roberta_classification_head.1} parent=47 // pred_check
        %p444 = pneg %p150
      $region50: #{roberta_classification_head.1} parent=47 // pred_check_branch
        %446 = sbr.rel (%p444) target = $region52
      $region51: #{roberta_classification_head.1} parent=47 // pred_region
        %p447 = scmp.lt.s32.totalorder %s17, 1
        %s448 = scalar_select %p447, %s17, 1
        %s449 = smul.addr %s448, 8
        %s450 = scalar_lea.vmem %s5, %s449
      $region52: #{roberta_classification_head.1} parent=47 // pred_fallthru
        _
    $region48: #{roberta_classification_head.1} parent=5 // pred_fallthru
      _
  $region6: #{roberta_classification_head.1} parent=0 // loop_footer
    %s15 = sadd.s32 1, %s11
  $region7: #{roberta_classification_head.1} parent=0 // loop_footer_branch
    %10 = sbr.rel target = $region3
  $region8: #{roberta_classification_head.1} parent=0 // loop_exit
    _

</llo_original>
